<compile_context>
chip_gen: v6e
topology: v6e:2x2x1
jax: 0.10.0
libtpu: 0.0.40
codegen_flags: <defaults>
</compile_context>

<pallas_src>
import math

import jax
import jax.numpy as jnp
from jax import lax
from jax.experimental import pallas as pl
from jax.experimental.pallas import tpu as pltpu


def _round_up(x: int, m: int) -> int:
    return ((x + m - 1) // m) * m


def _cdiv(a: int, b: int) -> int:
    return -(-a // b)


# ---------------------------------------------------------------------------
# Per-generation tuning (VMEM capacity, resident-path ntoken cap, gather block)
# ntoken_cap ~ 2*MXU_flops / (0.15 * HBM_BW): crossover between the one-hot
# MXU gather and a latency-bound per-row DMA gather (~15% of HBM roofline).
# ---------------------------------------------------------------------------
_GEN_CFG = {
    "v5e":     dict(vmem_bytes=128 << 20, ntoken_cap=4096, gather_block=1024),
    "v6e":     dict(vmem_bytes=128 << 20, ntoken_cap=8192, gather_block=1024),
    "v7x":     dict(vmem_bytes=64 << 20,  ntoken_cap=4096, gather_block=512),
    "unknown": dict(vmem_bytes=64 << 20,  ntoken_cap=4096, gather_block=512),
}


def _tpu_generation() -> str:
    try:
        kind = jax.devices()[0].device_kind.lower()
    except Exception:
        return "unknown"
    if "v5" in kind:
        return "v5e"
    if "v6" in kind:
        return "v6e"
    if "v7" in kind or "7x" in kind:
        return "v7x"
    return "unknown"


def _choose_block_t(num_tokens: int, token_block: int) -> int:
    """Sublane-aligned token block; keep >= 2 grid steps when possible.

    The token-block axis is the only "parallel" axis, so a single grid step
    would leave the second TensorCore idle on v7x.
    """
    block_t = min(token_block, _round_up(num_tokens, 8))
    if num_tokens > 8 and _round_up(num_tokens, block_t) // block_t < 2:
        block_t = _round_up(_cdiv(num_tokens, 2), 8)
    return block_t


# ---------------------------------------------------------------------------
# Path 1: table VMEM-resident, gather as a 1-pass bf16 one-hot MXU matmul.
# ---------------------------------------------------------------------------
def _vmem_resident_embed(ids_flat, table_bf16, scale, block_t, vmem_limit):
    num_tokens = ids_flat.shape[0]
    ntoken, d_model = table_bf16.shape

    padded = _round_up(num_tokens, block_t)
    num_blocks = padded // block_t
    ids2d = jnp.pad(ids_flat, (0, padded - num_tokens)).reshape(padded, 1)

    def kernel(ids_ref, table_ref, out_ref):
        # Clamp ids (consistent with the HBM path; never selects a bad row).
        ids = jnp.clip(ids_ref[...], 0, ntoken - 1)              # (T, 1) i32
        iota = lax.broadcasted_iota(jnp.int32, (block_t, ntoken), 1)
        onehot = (ids == iota).astype(jnp.bfloat16)               # exact 0/1
        # Single MXU pass (DEFAULT precision), f32 accumulation.
        # TODO(synk): benchmark jnp.take(table_ref[...], ids, axis=0) vs the
        # one-hot matmul per (ntoken, d_model) and keep the winner.
        gathered = jnp.dot(onehot, table_ref[...],
                           preferred_element_type=jnp.float32)
        out_ref[...] = gathered * scale

    out = pl.pallas_call(
        kernel,
        out_shape=jax.ShapeDtypeStruct((padded, d_model), jnp.float32),
        grid=(num_blocks,),
        in_specs=[
            # Per-block ids (T, 1) in VMEM.
            pl.BlockSpec((block_t, 1), lambda i: (i, 0)),
            # Full table, constant index map -> fetched once, stays resident
            # (the pipeline still reserves a 2nd buffer; the VMEM gate below
            # budgets for 2x table bytes).
            # TODO(synk): pipeline_mode=pl.Buffered(1) would reclaim the idle
            # second buffer on JAX versions where the main pipeline honors it.
            pl.BlockSpec((ntoken, d_model), lambda i: (0, 0)),
        ],
        out_specs=pl.BlockSpec((block_t, d_model), lambda i: (i, 0)),
        compiler_params=pltpu.CompilerParams(
            dimension_semantics=("parallel",),
            vmem_limit_bytes=vmem_limit,
        ),
    )(ids2d, table_bf16)

    return out[:num_tokens]


# ---------------------------------------------------------------------------
# Path 2: table in HBM, manual per-row DMA gather directly into the pipelined
# output block, up to 16 copies in flight, 8x-unrolled issue loop.
# ---------------------------------------------------------------------------
_MAX_OUTSTANDING_DMAS = 16
_GATHER_UNROLL = 8


def _hbm_gather_embed(ids_flat, emb_table, scale, block_t, vmem_limit):
    num_tokens = ids_flat.shape[0]
    ntoken, d_model = emb_table.shape

    padded = _round_up(num_tokens, block_t)
    num_blocks = padded // block_t
    nsem = min(_MAX_OUTSTANDING_DMAS, block_t)
    unroll = min(_GATHER_UNROLL, block_t)      # block_t is a multiple of 8

    ids_p = jnp.pad(ids_flat, (0, padded - num_tokens))

    # TODO(synk): for extremely long sequences, chunk ids per token block
    # (blocked SMEM input or per-block HBM->SMEM DMA) instead of scalar-
    # prefetching the whole flattened id vector (1-D SMEM pads to next_pow2).

    def kernel(ids_ref, table_hbm, out_ref, sems):
        base = pl.program_id(0) * block_t
        last = padded - 1

        def read_row(r):
            # Clamp the SMEM index (prefetch horizon can run past the block)
            # and the id (a bad id must never become an OOB HBM DMA).
            idx = jnp.minimum(base + r, last)
            return jnp.clip(ids_ref[idx], 0, ntoken - 1)

        def start_copy(r, row):
            pltpu.make_async_copy(
                table_hbm.at[pl.ds(row, 1), :],
                out_ref.at[pl.ds(r, 1), :],     # gather straight into out_ref
                sems.at[r % nsem],
            ).start()

        def wait_copy(r):
            # Fixed-slice descriptor: only the semaphore + byte count matter.
            pltpu.make_async_copy(
                table_hbm.at[pl.ds(0, 1), :],
                out_ref.at[pl.ds(0, 1), :],
                sems.at[r % nsem],
            ).wait()

        # Prime the pipeline: keep `nsem` row gathers in flight.
        for r in range(nsem):                   # static unroll, small
            start_copy(r, read_row(r))

        def body(j, carry):
            for u in range(unroll):             # static 8x unroll
                r = j * unroll + u
                nxt = r + nsem
                # Scalar id read BEFORE the wait: .wait() breaks SMEM
                # sst->sld forwarding, so hoisting avoids a per-row stall.
                nxt_row = read_row(nxt)
                wait_copy(r)

                @pl.when(nxt < block_t)
                def _(nxt=nxt, nxt_row=nxt_row):
                    start_copy(nxt, nxt_row)

            return carry

        lax.fori_loop(0, block_t // unroll, body, 0)

        # Scale in place (free VPU work under a DMA-bound kernel).
        out_ref[...] = out_ref[...] * scale

    grid_spec = pltpu.PrefetchScalarGridSpec(
        num_scalar_prefetch=1,                          # ids -> SMEM
        grid=(num_blocks,),
        in_specs=[pl.BlockSpec(memory_space=pl.ANY)],   # table stays in HBM
        out_specs=pl.BlockSpec((block_t, d_model), lambda i, ids: (i, 0)),
        scratch_shapes=[pltpu.SemaphoreType.DMA((nsem,))],
    )

    out = pl.pallas_call(
        kernel,
        out_shape=jax.ShapeDtypeStruct((padded, d_model), jnp.float32),
        grid_spec=grid_spec,
        compiler_params=pltpu.CompilerParams(
            dimension_semantics=("parallel",),
            vmem_limit_bytes=vmem_limit,
        ),
    )(ids_p, emb_table)

    return out[:num_tokens]


# ---------------------------------------------------------------------------
# Public wrapper (mirrors the PyTorch Embedder module).
# ---------------------------------------------------------------------------
def make_embedder(
    ntoken: int,
    d_model: int,
    key: jax.Array,
    *,
    onehot_token_block: int = 256,
    gather_token_block: int | None = None,
):
    """Builds the embedding table and returns (params, apply_fn)."""
    # nn.Embedding default init: weights ~ N(0, 1)
    emb_table = jax.random.normal(key, (ntoken, d_model), dtype=jnp.float32)
    table_bf16 = emb_table.astype(jnp.bfloat16)   # fast-path copy (1 MXU pass)
    scale = float(math.sqrt(d_model))

    cfg = _GEN_CFG.get(_tpu_generation(), _GEN_CFG["unknown"])
    physical_vmem = cfg["vmem_bytes"]
    if gather_token_block is None:
        gather_token_block = cfg["gather_block"]

    def resident_need(block_t: int) -> int:
        return (2 * ntoken * d_model * 2           # bf16 table, 2 pipeline bufs
                + 2 * block_t * d_model * 4        # f32 output block, 2 bufs
                + 2 * block_t * 4                  # ids block, 2 bufs
                + 2 * block_t * ntoken * 2)        # one-hot temporaries (bf16)

    resident_budget = int(0.6 * physical_vmem)
    use_resident = (resident_need(onehot_token_block) <= resident_budget
                    and ntoken <= cfg["ntoken_cap"])

    def apply(x_ids: jax.Array, *, force_hbm_gather: bool = False) -> jax.Array:
        orig_shape = x_ids.shape
        ids_flat = x_ids.reshape(-1).astype(jnp.int32)
        n = int(ids_flat.shape[0])

        if use_resident and not force_hbm_gather:
            block_t = _choose_block_t(n, onehot_token_block)
            vmem_limit = min(int(0.85 * physical_vmem),
                             max(32 << 20, resident_need(block_t) + (16 << 20)))
            out_flat = _vmem_resident_embed(ids_flat, table_bf16, scale,
                                            block_t, vmem_limit)
        else:
            block_t = _choose_block_t(n, gather_token_block)
            vmem_limit = min(int(0.85 * physical_vmem),
                             max(32 << 20,
                                 2 * block_t * d_model * 4 + (16 << 20)))
            out_flat = _hbm_gather_embed(ids_flat, emb_table, scale,
                                         block_t, vmem_limit)
        return out_flat.reshape(*orig_shape, d_model)

    return emb_table, apply


if __name__ == "__main__":
    ntoken = 64
    d_model = 128
    batch, seq = 2, 8

    key = jax.random.PRNGKey(0)
    k_emb, k_ids = jax.random.split(key)

    emb_table, embedder = make_embedder(ntoken, d_model, k_emb)
    x = jax.random.randint(k_ids, (batch, seq), 0, ntoken, dtype=jnp.int32)

    scale = math.sqrt(d_model)
    ref = emb_table[x] * scale
    # Fast path routes the table through bf16 (documented, not bit-exact).
    ref_bf16 = emb_table.astype(jnp.bfloat16).astype(jnp.float32)[x] * scale

    # Fast path: VMEM-resident bf16 table, 1-pass one-hot MXU gather.
    out_fast = jax.block_until_ready(embedder(x))
    assert out_fast.shape == (batch, seq, d_model)
    assert jnp.allclose(out_fast, ref_bf16, rtol=1e-4, atol=1e-4)
    assert jnp.allclose(out_fast, ref, rtol=2e-2, atol=2e-2)

    # General path: HBM table + deep manual per-row DMA gather (bit-exact rows).
    out_gather = jax.block_until_ready(embedder(x, force_hbm_gather=True))
    assert out_gather.shape == (batch, seq, d_model)
    assert jnp.allclose(out_gather, ref, rtol=1e-6, atol=1e-6)

    print("KERNEL_OK")
</pallas_src>

<mosaic_0001>
module attributes {stable_mosaic.version = 11 : i64} {
  func.func @kernel(%arg0: i32, %arg1: memref<8x1xi32, #tpu.memory_space<vmem>>, %arg2: memref<64x128xbf16, #tpu.memory_space<vmem>>, %arg3: memref<8x128xf32, #tpu.memory_space<vmem>>) attributes {dimension_semantics = [#tpu.dimension_semantics<parallel>], iteration_bounds = array<i64: 2>, scalar_prefetch = 0 : i64, scratch_operands = 0 : i64, tpu.core_type = #tpu.core_type<tc>, window_params = [{transform_indices = @transform_0, window_bounds = array<i64: 8, 1>}, {pipeline_mode = #tpu.pipeline_mode<synchronous>, transform_indices = @transform_1, window_bounds = array<i64: 64, 128>}, {transform_indices = @transform_2, window_bounds = array<i64: 8, 128>}]} {
    %c0 = arith.constant 0 : index
    %c0_0 = arith.constant 0 : index
    %0 = vector.load %arg1[%c0, %c0_0] : memref<8x1xi32, #tpu.memory_space<vmem>>, vector<8x1xi32>
    %c0_i32 = arith.constant 0 : i32
    %c63_i32 = arith.constant 63 : i32
    %1 = vector.broadcast %c0_i32 : i32 to vector<8x1xi32>
    %2 = arith.maxsi %1, %0 : vector<8x1xi32>
    %3 = vector.broadcast %c63_i32 : i32 to vector<8x1xi32>
    %4 = arith.minsi %3, %2 : vector<8x1xi32>
    %5 = tpu.iota {dimensions = array<i32: 1>} : vector<8x64xi32>
    %6 = vector.broadcast %4 : vector<8x1xi32> to vector<8x64xi32>
    %7 = arith.cmpi eq, %6, %5 : vector<8x64xi32>
    %8 = arith.extui %7 : vector<8x64xi1> to vector<8x64xi32>
    %9 = arith.sitofp %8 : vector<8x64xi32> to vector<8x64xf32>
    %10 = arith.truncf %9 : vector<8x64xf32> to vector<8x64xbf16>
    %c0_1 = arith.constant 0 : index
    %c0_2 = arith.constant 0 : index
    %11 = vector.load %arg2[%c0_1, %c0_2] : memref<64x128xbf16, #tpu.memory_space<vmem>>, vector<64x128xbf16>
    %cst = arith.constant dense<0.000000e+00> : vector<8x128xf32>
    %12 = tpu.matmul %10, %11, %cst {dimension_numbers = #tpu.dot_dimension_numbers<[1], [0], [0], [1], [0, 0, 1, 1], [], []>} : vector<8x64xbf16>, vector<64x128xbf16>, vector<8x128xf32> -> vector<8x128xf32>
    %cst_3 = arith.constant 11.3137083 : f32
    %13 = vector.broadcast %cst_3 : f32 to vector<8x128xf32>
    %14 = arith.mulf %12, %13 : vector<8x128xf32>
    %c0_4 = arith.constant 0 : index
    %c0_5 = arith.constant 0 : index
    %15 = vector.load %arg3[%c0_4, %c0_5] : memref<8x128xf32, #tpu.memory_space<vmem>>, vector<8x128xf32>
    tpu.vector_store %arg3[%c0_4, %c0_5], %14 {strides = array<i32>} : memref<8x128xf32, #tpu.memory_space<vmem>>, vector<8x128xf32>,
    return
  }
  func.func @transform_0(%arg0: i32) -> (i32, i32) {
    %c0_i32 = arith.constant 0 : i32
    %c0_i32_0 = arith.constant 0 : i32
    return %arg0, %c0_i32 : i32, i32
  }
  func.func @transform_1(%arg0: i32) -> (i32, i32) {
    %c0_i32 = arith.constant 0 : i32
    %c0_i32_0 = arith.constant 0 : i32
    %c0_i32_1 = arith.constant 0 : i32
    return %c0_i32, %c0_i32_0 : i32, i32
  }
  func.func @transform_2(%arg0: i32) -> (i32, i32) {
    %c0_i32 = arith.constant 0 : i32
    %c0_i32_0 = arith.constant 0 : i32
    return %arg0, %c0_i32 : i32, i32
  }
}

</mosaic_0001>

<llo_original>
// kernel: tpu_custom_call.1
$region0: #{tpu_custom_call.1}
  #allocation0 [shape = 'u32[]', space=smem, size = 0x4, offset = 0x4, fixed_abs, tag = 'smem constant byte address 0x4 - core index']
  #allocation1 [shape = 'u32[144,128]{1,0:T(1,128)}', space=vmem, size = 0x12000, scoped, tag = 'internal scratch']
  %s0 = inlined_call_operand.vmem [shape: s32[16,1], index: 0, kind: input, shape index: {}]
  %s1 = inlined_call_operand.hbm [shape: bf16[64,128], index: 1, kind: input, shape index: {}]
  %s2 = inlined_call_operand.hbm [shape: f32[16,128], index: 2, kind: output, shape index: {}]
  %s3 = sld [smem:[#allocation0]]
  $region45: #{tpu_custom_call.1} parent=0
    _
  %s5 = ssub.s32 1, %s3
  %s6 = scalar_select 0, %s5, %s3
  $region1: #{tpu_custom_call.1} parent=0
    #allocation2 [shape = 'u8[16384]{0}', space=vmem, size = 0x4000, scoped, tag = 'input window, operand 1, single buffered']
    #allocation3 [shape = 's32[2]{0}', space=sflag, size = 0x8, scoped, tag = 'scoped memory for tpu_custom_call.1']
    #allocation4 [shape = 's32[2]{0}', space=sflag, size = 0x8, scoped, tag = 'scoped memory for tpu_custom_call.1']
    #allocation5 [shape = 'u8[8192]{0}', space=vmem, size = 0x2000, scoped, tag = 'output window, operand 0']
    %7 = vsyncpa [#allocation3], 0
    %8 = vsyncpa [#allocation4], 0
    %s9 = scalar_lea.sflag [#allocation4], 1
    %10 = vsyncpa %s9, 0
    loop: start=0, step=1, limit=4
    $region2: #{tpu_custom_call.1} parent=1 // loop_pre_header
      _
    $region3: #{tpu_custom_call.1} parent=1 // loop_header
      %s12 = sphi 0, %s16
      %p13 = scmp.ge.s32.totalorder %s12, 4
      %s22 = sphi 0, %s24
      %s25 = sphi 0, %s22
      %s26 = sphi 0, %s25
      %s42 = sphi 0, %s26
      %s46 = sphi 0, %s46
      %s48 = sphi 0, %s46
      %s49 = sphi 0, %s48
      %s63 = sphi 0, %s49
      %s69 = sphi 0, %s71
      %s72 = sphi 0, %s69
      %s73 = sphi 0, %s72
      %s89 = sphi 0, %s73
    $region4: #{tpu_custom_call.1} parent=1 // loop_header_branch
      %15 = sbr.rel (%p13) target = $region8
    $region5: #{tpu_custom_call.1} parent=1 // loop_body
      %s17 = ssub.s32 %s12, 1
      %s18 = ssub.s32 %s12, 2
      %s19 = sadd.s32 %s12, 1
      %s20 = ssub.s32 %s12, %s19
      %p21 = scmp.eq.s32.totalorder %s20, 0
      %s23 = sadd.s32 %s22, 1
      %s24 = scalar_select %p21, %s22, %s23
      %p27 = pneg %p21
      %p28 = scmp.eq.s32.totalorder %s12, 1
      %p29 = por %p27, %p28
      %p30 = scmp.ne.s32.totalorder %s22, %s25
      %p31 = scmp.eq.s32.totalorder %s12, 0
      %p32 = por %p30, %p31
      %p33 = scmp.ne.s32.totalorder %s22, %s25
      %p34 = scmp.eq.s32.totalorder %s17, 1
      %p35 = por %p33, %p34
      %p36 = scmp.ne.s32.totalorder %s25, %s26
      %p37 = scmp.eq.s32.totalorder %s17, 0
      %p38 = por %p36, %p37
      %p39 = scmp.ne.s32.totalorder %s25, %s26
      %p40 = scmp.eq.s32.totalorder %s18, 1
      %p41 = por %p39, %p40
      %p43 = scmp.ne.s32.totalorder %s26, %s42
      %p44 = scmp.eq.s32.totalorder %s18, 0
      %p45 = por %p43, %p44
      %s47 = sadd.s32 %s46, 1
      %p50 = scmp.eq.s32.totalorder %s12, 1
      %p51 = scmp.ne.s32.totalorder %s46, %s48
      %p52 = scmp.eq.s32.totalorder %s12, 0
      %p53 = por %p51, %p52
      %p54 = scmp.ne.s32.totalorder %s46, %s48
      %p55 = scmp.eq.s32.totalorder %s17, 1
      %p56 = por %p54, %p55
      %p57 = scmp.ne.s32.totalorder %s48, %s49
      %p58 = scmp.eq.s32.totalorder %s17, 0
      %p59 = por %p57, %p58
      %p60 = scmp.ne.s32.totalorder %s48, %s49
      %p61 = scmp.eq.s32.totalorder %s18, 1
      %p62 = por %p60, %p61
      %p64 = scmp.ne.s32.totalorder %s49, %s63
      %p65 = scmp.eq.s32.totalorder %s18, 0
      %p66 = por %p64, %p65
      %s67 = ssub.s32 %s12, %s19
      %p68 = scmp.eq.s32.totalorder %s67, 0
      %s70 = sadd.s32 %s69, 1
      %s71 = scalar_select %p68, %s69, %s70
      %p74 = pneg %p68
      %p75 = scmp.eq.s32.totalorder %s12, 1
      %p76 = por %p74, %p75
      %p77 = scmp.ne.s32.totalorder %s69, %s72
      %p78 = scmp.eq.s32.totalorder %s12, 0
      %p79 = por %p77, %p78
      %p80 = scmp.ne.s32.totalorder %s69, %s72
      %p81 = scmp.eq.s32.totalorder %s17, 1
      %p82 = por %p80, %p81
      %p83 = scmp.ne.s32.totalorder %s72, %s73
      %p84 = scmp.eq.s32.totalorder %s17, 0
      %p85 = por %p83, %p84
      %p86 = scmp.ne.s32.totalorder %s72, %s73
      %p87 = scmp.eq.s32.totalorder %s18, 1
      %p88 = por %p86, %p87
      %p90 = scmp.ne.s32.totalorder %s73, %s89
      %p91 = scmp.eq.s32.totalorder %s18, 0
      %p92 = por %p90, %p91
      %p93 = scmp.le.s32.totalorder 1, %s12
      %p94 = scmp.lt.s32.totalorder %s12, 3
      %p95 = pnand %p93, %p94
      %p96 = pneg %p95
      // Predicated region
      $region9: #{tpu_custom_call.1} parent=5 // pred_check
        _
      $region10: #{tpu_custom_call.1} parent=5 // pred_check_branch
        %98 = sbr.rel (%p95) target = $region12
      $region11: #{tpu_custom_call.1} parent=5 // pred_region
        %s99 = ssub.s32 %s12, 1
        // Predicated region
        $region13: #{tpu_custom_call.1} parent=11 // pred_check
          %p100 = pneg %p59
        $region14: #{tpu_custom_call.1} parent=11 // pred_check_branch
          %102 = sbr.rel (%p100) target = $region16
        $region15: #{tpu_custom_call.1} parent=11 // pred_region
          %s104 = ssub.s32 512, 512
          %105 = vsyncadd [#allocation3], %s104
          %s106 = sshll.u32 [#allocation2], 4
          %s107 = int_to_ptr.vmem [resolvable:$true] %s106
          %112 = dma.hbm_to_vmem [thread:$0]  %s1, 512, %s107, [#allocation3], 64, 64, 4
        $region16: #{tpu_custom_call.1} parent=11 // pred_fallthru
          _
      $region12: #{tpu_custom_call.1} parent=5 // pred_fallthru
        _
      %p113 = scmp.lt.s32.totalorder %s12, 2
      // Predicated region
      $region17: #{tpu_custom_call.1} parent=5 // pred_check
        %p114 = pneg %p113
      $region18: #{tpu_custom_call.1} parent=5 // pred_check_branch
        %116 = sbr.rel (%p114) target = $region20
      $region19: #{tpu_custom_call.1} parent=5 // pred_region
        // Predicated region
        $region21: #{tpu_custom_call.1} parent=19 // pred_check
          %p117 = pneg %p32
        $region22: #{tpu_custom_call.1} parent=19 // pred_check_branch
          %119 = sbr.rel (%p117) target = $region24
        $region23: #{tpu_custom_call.1} parent=19 // pred_region
          %p120 = scmp.lt.s32.totalorder %s12, 1
          %s121 = scalar_select %p120, %s12, 1
          %s122 = smul.addr %s121, 8
          %s123 = scalar_lea.vmem %s0, %s122
        $region24: #{tpu_custom_call.1} parent=19 // pred_fallthru
          _
      $region20: #{tpu_custom_call.1} parent=5 // pred_fallthru
        _
      %p124 = scmp.le.s32.totalorder 1, %s12
      %p125 = scmp.lt.s32.totalorder %s12, 3
      %p126 = pnand %p124, %p125
      %p127 = pneg %p126
      // Predicated region
      $region25: #{tpu_custom_call.1} parent=5 // pred_check
        _
      $region26: #{tpu_custom_call.1} parent=5 // pred_check_branch
        %129 = sbr.rel (%p126) target = $region28
      $region27: #{tpu_custom_call.1} parent=5 // pred_region
        %s130 = ssub.s32 %s12, 1
        // Predicated region
        $region29: #{tpu_custom_call.1} parent=27 // pred_check
          %p131 = pneg %p59
        $region30: #{tpu_custom_call.1} parent=27 // pred_check_branch
          %133 = sbr.rel (%p131) target = $region32
        $region31: #{tpu_custom_call.1} parent=27 // pred_region
          %134 = dma.done [#allocation3], 512
        $region32: #{tpu_custom_call.1} parent=27 // pred_fallthru
          _
        %p135 = scmp.lt.s32.totalorder %s17, 1
        %s136 = scalar_select %p135, %s17, 1
        %s137 = smul.addr %s136, 8
        %s138 = scalar_lea.vmem %s0, %s137
        %p139 = pneg %p38
        %p140 = pneg %p35
        %p141 = pneg %p59
        %p142 = pneg %p56
        %p143 = pneg %p85
        %p144 = pneg %p82
        %s145 = sand.u32 %s72, 1
        %s146 = scalar_lea.sflag [#allocation4], %s145
        %s147 = sand.u32 %s72, 1
        %s148 = smul.addr %s147, 8
        %s149 = scalar_lea.vmem [#allocation5], %s148
        %p150 = scmp.lt.s32.totalorder %s17, 1
        %s151 = scalar_select %p150, %s17, 1
        %s152 = smul.addr %s151, 8
        %s153 = scalar_lea.vmem %s0, %s152
        %v155 = vld [vmem:[%s153] sm:$0xff]
        %vm156 = vcmp.gt.s32.totalorder %v155, 0
        %v157 = vsel %vm156, %v155, 0
        %vm158 = vcmp.lt.s32.totalorder %v157, 63
        %v159 = vsel %vm158, %v157, 63
        %v160 = vlaneseq
        %v161 = vand.u32 %v160, 127
        %162 = vset.pattern.permute.xlu0 0
        %163 = vperm.xlu0 %162, %v159
        %v164 = vpop.permute.xlu0 %163
        %vm165 = vcmp.eq.s32.totalorder %v164, %v161
        %v166 = vsel %vm165, 1, 0
        %v167 = vcvt.s32.f32 %v166
        %v168 = vpack.c.bf16 %v167, %v167
        %v169 = vld [vmem:[#allocation2] sm:$0xf]
        %v170 = vld [vmem:[#allocation2 + $0x4] sm:$0xf]
        %v171 = vld [vmem:[#allocation2 + $0x8] sm:$0xf]
        %v172 = vld [vmem:[#allocation2 + $0xc] sm:$0xf]
        %v173 = vld [vmem:[#allocation2 + $0x10] sm:$0xf]
        %v174 = vld [vmem:[#allocation2 + $0x14] sm:$0xf]
        %v175 = vld [vmem:[#allocation2 + $0x18] sm:$0xf]
        %v176 = vld [vmem:[#allocation2 + $0x1c] sm:$0xf]
        %v185 = vunpack.c.l.b16 %v169
        %v186 = vunpack.c.l.b16 %v170
        %v187 = vunpack.c.l.b16 %v171
        %v188 = vunpack.c.l.b16 %v172
        %v189 = vunpack.c.l.b16 %v173
        %v190 = vunpack.c.l.b16 %v174
        %v191 = vunpack.c.l.b16 %v175
        %v192 = vunpack.c.l.b16 %v176
        %v193 = vpack.c.b16 %v186, %v185
        %v194 = vpack.c.b16 %v188, %v187
        %v195 = vpack.c.b16 %v190, %v189
        %v196 = vpack.c.b16 %v192, %v191
        %vm201 = vcmask 523264
        %v203 = vsel %vm201, %v168, 0
        %205 = vmatprep.subr.bf16.mxu0 0
        %206 = vmatpush1.bf16.msra.mxu0 0
        %207 = vmatprep.subr.bf16.mxu0 0
        %208 = vmatpush1.bf16.msra.mxu0 0
        %209 = vmatprep.subr.bf16.mxu0 0
        %210 = vmatpush1.bf16.msra.mxu0 0
        %211 = vmatprep.subr.bf16.mxu0 0
        %212 = vmatpush1.bf16.msra.mxu0 0
        %213 = vmatprep.subr.bf16.mxu0 0
        %214 = vmatpush1.bf16.msra.mxu0 %v196
        %215 = vmatprep.subr.bf16.mxu0 0
        %216 = vmatpush1.bf16.msra.mxu0 %v195
        %217 = vmatprep.subr.bf16.mxu0 0
        %218 = vmatpush1.bf16.msra.mxu0 %v194
        %219 = vmatprep.subr.bf16.mxu0 0
        %220 = vmatpush1.bf16.msra.mxu0 %v193
        %221 = vmatprep.subr.bf16.mxu0 0
        %222 = vmatpush2.bf16.msra.mxu0 0
        %223 = vmatprep.subr.bf16.mxu0 0
        %224 = vmatpush2.bf16.msra.mxu0 0
        %225 = vmatprep.subr.bf16.mxu0 0
        %226 = vmatpush2.bf16.msra.mxu0 0
        %227 = vmatprep.subr.bf16.mxu0 0
        %228 = vmatpush2.bf16.msra.mxu0 0
        %229 = vmatprep.subr.bf16.mxu0 0
        %230 = vmatpush2.bf16.msra.mxu0 0
        %231 = vmatprep.subr.bf16.mxu0 0
        %232 = vmatpush2.bf16.msra.mxu0 0
        %233 = vmatprep.subr.bf16.mxu0 0
        %234 = vmatpush2.bf16.msra.mxu0 0
        %235 = vmatprep.subr.bf16.mxu0 0
        %236 = vmatpush2.bf16.msra.mxu0 0
        %237 = vmatprep.mubr.bf16.mxu0 0
        %238 = vmatmul.mubr.bf16.gmra.mxu0 %v203
        %v239 = vpop.f32.mrf.mxu0
        %v240 = vadd.f32 0.0, %v239
        %v241 = vpop.f32.mrf.mxu0
        %v242 = vpop.f32.mrf.mxu0
        %v243 = vpop.f32.mrf.mxu0
        %244 = vdwg.mxu0
        %v245 = vmul.f32 %v240, 11.313708
        %246 = vst [vmem:[%s149] sm:$0xff] %v245
        %s247 = sand.u32 %s72, 1
        %s248 = scalar_lea.sflag [#allocation4], %s247
        %s249 = sand.u32 %s72, 1
        %s250 = smul.addr %s249, 8
        %s251 = scalar_lea.vmem [#allocation5], %s250
        // Predicated region
        $region33: #{tpu_custom_call.1} parent=27 // pred_check
          %p252 = pneg %p82
        $region34: #{tpu_custom_call.1} parent=27 // pred_check_branch
          %254 = sbr.rel (%p252) target = $region36
        $region35: #{tpu_custom_call.1} parent=27 // pred_region
          %s256 = ssub.s32 128, 128
          %257 = vsyncadd %s248, %s256
          %s258 = smul.addr %s17, 128
          %s259 = scalar_lea.hbm %s2, %s258
          %s261 = sshll.u32 %s251, 4
          %s262 = int_to_ptr.vmem [resolvable:$true] %s261
          %264 = dma.vmem_to_hbm [thread:$0]  %s262, 128, %s259, %s248
        $region36: #{tpu_custom_call.1} parent=27 // pred_fallthru
          _
      $region28: #{tpu_custom_call.1} parent=5 // pred_fallthru
        _
      %p265 = scmp.le.s32.totalorder 2, %s12
      // Predicated region
      $region37: #{tpu_custom_call.1} parent=5 // pred_check
        %p266 = pneg %p265
      $region38: #{tpu_custom_call.1} parent=5 // pred_check_branch
        %268 = sbr.rel (%p266) target = $region40
      $region39: #{tpu_custom_call.1} parent=5 // pred_region
        %s269 = ssub.s32 %s12, 2
        // Predicated region
        $region41: #{tpu_custom_call.1} parent=39 // pred_check
          %p270 = pneg %p88
        $region42: #{tpu_custom_call.1} parent=39 // pred_check_branch
          %272 = sbr.rel (%p270) target = $region44
        $region43: #{tpu_custom_call.1} parent=39 // pred_region
          %s273 = sand.u32 %s73, 1
          %s274 = scalar_lea.sflag [#allocation4], %s273
          %s275 = sand.u32 %s73, 1
          %s276 = smul.addr %s275, 8
          %s277 = scalar_lea.vmem [#allocation5], %s276
          %278 = dma.done %s274, 128
        $region44: #{tpu_custom_call.1} parent=39 // pred_fallthru
          _
      $region40: #{tpu_custom_call.1} parent=5 // pred_fallthru
        _
    $region6: #{tpu_custom_call.1} parent=1 // loop_footer
      %s16 = sadd.s32 1, %s12
    $region7: #{tpu_custom_call.1} parent=1 // loop_footer_branch
      %11 = sbr.rel target = $region3
    $region8: #{tpu_custom_call.1} parent=1 // loop_exit
      _
    %279 = vsyncpa [#allocation3], 1
    %s280 = scalar_lea.sflag [#allocation3], 1
    %281 = vsyncpa %s280, 1
    %282 = vsyncpa [#allocation4], 1
    %s283 = scalar_lea.sflag [#allocation4], 1
    %284 = vsyncpa %s283, 1

</llo_original>
